<compile_context>
chip_gen: v5e
topology: v5e:2x2
jax: 0.10.0
libtpu: 0.0.40
codegen_flags: <defaults>
</compile_context>

<pallas_src>
import functools
import math

import jax
import jax.numpy as jnp
from jax import lax
from jax.experimental import pallas as pl
from jax.experimental.pallas import tpu as pltpu


NODE_TYPES = ("author", "paper")
EDGE_TYPES = (("author", "writes", "paper"), ("paper", "rev_writes", "author"))


# ----------------------------------------------------------------------------
# in-kernel helpers (bf16-fed MXU, f32 accumulation)
# ----------------------------------------------------------------------------
def _mxu_dot(x, w):
    """x @ w on the MXU, bf16 inputs, f32 accumulation."""
    return lax.dot_general(
        x.astype(jnp.bfloat16), w.astype(jnp.bfloat16),
        dimension_numbers=(((1,), (0,)), ((), ())),
        preferred_element_type=jnp.float32)


def _dot_qkt(q, k):
    """q @ k.T via contraction of the last dims (no transposed tile)."""
    return lax.dot_general(
        q.astype(jnp.bfloat16), k.astype(jnp.bfloat16),
        dimension_numbers=(((1,), (1,)), ((), ())),
        preferred_element_type=jnp.float32)


# ----------------------------------------------------------------------------
# Pallas kernels
# ----------------------------------------------------------------------------
def _linear_kernel(x_ref, w_ref, b_ref, o_ref, *, post_relu):
    x = x_ref[...].astype(jnp.float32)
    y = _mxu_dot(x, w_ref[...]) + b_ref[...].astype(jnp.float32)
    if post_relu:
        y = jnp.maximum(y, 0.0)
    o_ref[...] = y.astype(o_ref.dtype)


def pallas_linear(x, w, b, *, post_relu=False):
    """y = relu?(x @ w + b); whole problem as one VMEM-resident tile."""
    n, f_in = x.shape
    f_out = w.shape[1]
    kern = functools.partial(_linear_kernel, post_relu=post_relu)
    return pl.pallas_call(
        kern,
        out_shape=jax.ShapeDtypeStruct((n, f_out), jnp.float32),
        in_specs=[
            pl.BlockSpec((n, f_in), lambda: (0, 0)),
            pl.BlockSpec((f_in, f_out), lambda: (0, 0)),
            pl.BlockSpec((1, f_out), lambda: (0, 0)),
        ],
        out_specs=pl.BlockSpec((n, f_out), lambda: (0, 0)),
    )(x, w, b.reshape(1, f_out))


def _hgt_conv_kernel(h_a_ref, h_p_ref,
                     wkqv_a_ref, bkqv_a_ref, wkqv_p_ref, bkqv_p_ref,
                     arel_ap_ref, mrel_ap_ref, arel_pa_ref, mrel_pa_ref,
                     mask_ap_ref, mask_pa_ref,
                     walin_a_ref, balin_a_ref, walin_p_ref, balin_p_ref,
                     alpha_ref,
                     out_a_ref, out_p_ref,
                     *, num_heads, head_dim):
    hidden = num_heads * head_dim
    h_a = h_a_ref[...].astype(jnp.float32)          # [Na, hidden]
    h_p = h_p_ref[...].astype(jnp.float32)          # [Np, hidden]

    # fused k|q|v projections: one MXU pass per node type
    kqv_a = _mxu_dot(h_a, wkqv_a_ref[...]) + bkqv_a_ref[...].astype(jnp.float32)
    kqv_p = _mxu_dot(h_p, wkqv_p_ref[...]) + bkqv_p_ref[...].astype(jnp.float32)
    k_a, q_a, v_a = (kqv_a[:, :hidden], kqv_a[:, hidden:2 * hidden],
                     kqv_a[:, 2 * hidden:])
    k_p, q_p, v_p = (kqv_p[:, :hidden], kqv_p[:, hidden:2 * hidden],
                     kqv_p[:, 2 * hidden:])

    def edge_messages(q_dst, k_src, v_src, a_bd_ref, m_bd_ref, mask):
        # a_bd already folds p_rel[h] / sqrt(D) into each head's diagonal block.
        k_rel = _mxu_dot(k_src, a_bd_ref[...])      # [Ns, hidden]
        v_rel = _mxu_dot(v_src, m_bd_ref[...])      # [Ns, hidden]
        msgs = []
        for h in range(num_heads):                  # static unroll, H small
            lo = h * head_dim
            hi = lo + head_dim
            scores = _dot_qkt(q_dst[:, lo:hi], k_rel[:, lo:hi])       # [Nd, Ns]
            scores = jnp.where(mask > 0, scores, jnp.float32(-1e30))
            mx = jnp.max(scores, axis=-1, keepdims=True)
            e = jnp.exp(scores - mx) * mask
            s = jnp.sum(e, axis=-1, keepdims=True)
            attn = e * pl.reciprocal(jnp.where(s > 0, s, 1.0), approx=True)
            msgs.append(_mxu_dot(attn, v_rel[:, lo:hi]))              # [Nd, D]
        return jnp.concatenate(msgs, axis=-1)                         # [Nd, hidden]

    mask_ap = mask_ap_ref[...].astype(jnp.float32)  # [Np, Na] author -> paper
    mask_pa = mask_pa_ref[...].astype(jnp.float32)  # [Na, Np] paper  -> author

    # group='sum' aggregation (each dst type has one incoming edge type here)
    agg_p = edge_messages(q_p, k_a, v_a, arel_ap_ref, mrel_ap_ref, mask_ap)
    agg_a = edge_messages(q_a, k_p, v_p, arel_pa_ref, mrel_pa_ref, mask_pa)

    # a_lin(gelu(.)) + sigmoid-gated skip  (gelu matches F.gelu, erf form)
    o_a = _mxu_dot(jax.nn.gelu(agg_a, approximate=False), walin_a_ref[...]) \
        + balin_a_ref[...].astype(jnp.float32)
    o_p = _mxu_dot(jax.nn.gelu(agg_p, approximate=False), walin_p_ref[...]) \
        + balin_p_ref[...].astype(jnp.float32)

    alpha_a = alpha_ref[0]                          # SMEM scalars
    alpha_p = alpha_ref[1]
    out_a_ref[...] = (alpha_a * o_a + (1.0 - alpha_a) * h_a).astype(out_a_ref.dtype)
    out_p_ref[...] = (alpha_p * o_p + (1.0 - alpha_p) * h_p).astype(out_p_ref.dtype)


def _block_diag_heads(w_hdd):
    """[H, D, D] per-head matrices -> [H*D, H*D] block-diagonal matrix."""
    H, D, _ = w_hdd.shape
    eye = jnp.eye(H, dtype=w_hdd.dtype)
    return jnp.einsum("hij,hg->higj", w_hdd, eye).reshape(H * D, H * D)


def hgt_conv_layer(conv, h_dict, mask_dict, *, num_heads, head_dim):
    """One HGTConv layer as a single fused pallas_call."""
    hidden = num_heads * head_dim
    scale = 1.0 / math.sqrt(head_dim)
    na = h_dict["author"].shape[0]
    npp = h_dict["paper"].shape[0]

    # parameter glue (tiny, done on parameters, not activations)
    et_ap, et_pa = EDGE_TYPES
    arel_ap = _block_diag_heads(conv["a_rel"][et_ap]
                                * (conv["p_rel"][et_ap] * scale)[:, None, None])
    mrel_ap = _block_diag_heads(conv["m_rel"][et_ap])
    arel_pa = _block_diag_heads(conv["a_rel"][et_pa]
                                * (conv["p_rel"][et_pa] * scale)[:, None, None])
    mrel_pa = _block_diag_heads(conv["m_rel"][et_pa])

    alpha = jnp.stack([jax.nn.sigmoid(conv["skip"]["author"]),
                       jax.nn.sigmoid(conv["skip"]["paper"])]).astype(jnp.float32)

    kern = functools.partial(_hgt_conv_kernel, num_heads=num_heads,
                             head_dim=head_dim)

    def vspec(shape):
        return pl.BlockSpec(shape, lambda: (0, 0))

    in_specs = [
        vspec((na, hidden)), vspec((npp, hidden)),
        vspec((hidden, 3 * hidden)), vspec((1, 3 * hidden)),
        vspec((hidden, 3 * hidden)), vspec((1, 3 * hidden)),
        vspec((hidden, hidden)), vspec((hidden, hidden)),
        vspec((hidden, hidden)), vspec((hidden, hidden)),
        vspec((npp, na)), vspec((na, npp)),
        vspec((hidden, hidden)), vspec((1, hidden)),
        vspec((hidden, hidden)), vspec((1, hidden)),
        pl.BlockSpec(memory_space=pltpu.MemorySpace.SMEM),
    ]
    out_specs = (pl.BlockSpec((na, hidden), lambda: (0, 0)),
                 pl.BlockSpec((npp, hidden), lambda: (0, 0)))
    out_shape = (jax.ShapeDtypeStruct((na, hidden), jnp.float32),
                 jax.ShapeDtypeStruct((npp, hidden), jnp.float32))

    out_a, out_p = pl.pallas_call(
        kern,
        out_shape=out_shape,
        in_specs=in_specs,
        out_specs=out_specs,
    )(h_dict["author"], h_dict["paper"],
      conv["kqv"]["author"][0], conv["kqv"]["author"][1].reshape(1, -1),
      conv["kqv"]["paper"][0], conv["kqv"]["paper"][1].reshape(1, -1),
      arel_ap, mrel_ap, arel_pa, mrel_pa,
      mask_dict[et_ap], mask_dict[et_pa],
      conv["a_lin"]["author"][0], conv["a_lin"]["author"][1].reshape(1, -1),
      conv["a_lin"]["paper"][0], conv["a_lin"]["paper"][1].reshape(1, -1),
      alpha)
    return {"author": out_a, "paper": out_p}


# ----------------------------------------------------------------------------
# HGT model (parameters + forward)
# ----------------------------------------------------------------------------
def _dense_init(key, shape, scale=0.1):
    return scale * jax.random.normal(key, shape, dtype=jnp.float32)


def init_hgt_params(key, in_dims, hidden, out_channels, num_heads, num_layers):
    assert hidden % num_heads == 0
    d = hidden // num_heads
    ks = iter(jax.random.split(key, 1024))
    params = {"lin_dict": {}, "convs": [], "lin": None}
    for nt in NODE_TYPES:
        params["lin_dict"][nt] = (_dense_init(next(ks), (in_dims[nt], hidden)),
                                  _dense_init(next(ks), (hidden,)))
    for _ in range(num_layers):
        conv = {"kqv": {}, "a_lin": {}, "skip": {},
                "a_rel": {}, "m_rel": {}, "p_rel": {}}
        for nt in NODE_TYPES:
            # k / q / v projections stored pre-fused as [hidden, 3*hidden]
            wk = _dense_init(next(ks), (hidden, hidden))
            wq = _dense_init(next(ks), (hidden, hidden))
            wv = _dense_init(next(ks), (hidden, hidden))
            bk = _dense_init(next(ks), (hidden,))
            bq = _dense_init(next(ks), (hidden,))
            bv = _dense_init(next(ks), (hidden,))
            conv["kqv"][nt] = (jnp.concatenate([wk, wq, wv], axis=1),
                               jnp.concatenate([bk, bq, bv], axis=0))
            conv["a_lin"][nt] = (_dense_init(next(ks), (hidden, hidden)),
                                 _dense_init(next(ks), (hidden,)))
            conv["skip"][nt] = jnp.float32(1.0)          # PyG init: ones
        for et in EDGE_TYPES:
            conv["a_rel"][et] = _dense_init(next(ks), (num_heads, d, d))
            conv["m_rel"][et] = _dense_init(next(ks), (num_heads, d, d))
            conv["p_rel"][et] = jnp.ones((num_heads,), jnp.float32)  # PyG init: ones
        params["convs"].append(conv)
    params["lin"] = (_dense_init(next(ks), (hidden, out_channels)),
                     _dense_init(next(ks), (out_channels,)))
    return params


def hgt_forward(params, x_dict, mask_dict, *, hidden, num_heads):
    d = hidden // num_heads

    # 1) per-node-type input projection + ReLU
    h_dict = {nt: pallas_linear(x_dict[nt], *params["lin_dict"][nt], post_relu=True)
              for nt in NODE_TYPES}

    # 2) HGTConv layers (one fused kernel per layer)
    for conv in params["convs"]:
        h_dict = hgt_conv_layer(conv, h_dict, mask_dict,
                                num_heads=num_heads, head_dim=d)

    # 3) final output projection on 'author'
    return pallas_linear(h_dict["author"], *params["lin"])


# ----------------------------------------------------------------------------
# main
# ----------------------------------------------------------------------------
if __name__ == "__main__":
    hidden_channels, out_channels, num_heads, num_layers = 32, 8, 4, 2
    num_nodes = {"author": 16, "paper": 24}
    in_dims = {"author": 12, "paper": 20}
    num_edges = 40

    key = jax.random.PRNGKey(0)
    k_feat, k_edge, k_par = jax.random.split(key, 3)

    # node features
    fkeys = jax.random.split(k_feat, len(NODE_TYPES))
    x_dict = {nt: jax.random.normal(fk, (num_nodes[nt], in_dims[nt]), dtype=jnp.float32)
              for nt, fk in zip(NODE_TYPES, fkeys)}

    # edge_index_dict -> dense [N_dst, N_src] 0/1 masks (same semantics as edge softmax)
    mask_dict = {}
    ekeys = jax.random.split(k_edge, len(EDGE_TYPES) * 2)
    for i, et in enumerate(EDGE_TYPES):
        src, _, dst = et
        s_idx = jax.random.randint(ekeys[2 * i], (num_edges,), 0, num_nodes[src])
        d_idx = jax.random.randint(ekeys[2 * i + 1], (num_edges,), 0, num_nodes[dst])
        mask = jnp.zeros((num_nodes[dst], num_nodes[src]), jnp.float32)
        mask_dict[et] = mask.at[d_idx, s_idx].set(1.0)

    params = init_hgt_params(k_par, in_dims, hidden_channels, out_channels,
                             num_heads, num_layers)

    out = hgt_forward(params, x_dict, mask_dict,
                      hidden=hidden_channels, num_heads=num_heads)
    out = jax.block_until_ready(out)
    assert out.shape == (num_nodes["author"], out_channels)
    assert bool(jnp.all(jnp.isfinite(out)))
    print("KERNEL_OK")
</pallas_src>

<mosaic_0001>
module attributes {stable_mosaic.version = 11 : i64} {
  func.func @_linear_kernel(%arg0: memref<16x12xf32, #tpu.memory_space<vmem>>, %arg1: memref<12x32xf32, #tpu.memory_space<vmem>>, %arg2: memref<1x32xf32, #tpu.memory_space<vmem>>, %arg3: memref<16x32xf32, #tpu.memory_space<vmem>>) attributes {dimension_semantics = [], scalar_prefetch = 0 : i64, scratch_operands = 0 : i64, tpu.core_type = #tpu.core_type<tc>} {
    %c0 = arith.constant 0 : index
    %c0_0 = arith.constant 0 : index
    %0 = vector.load %arg0[%c0, %c0_0] : memref<16x12xf32, #tpu.memory_space<vmem>>, vector<16x12xf32>
    %c0_1 = arith.constant 0 : index
    %c0_2 = arith.constant 0 : index
    %1 = vector.load %arg1[%c0_1, %c0_2] : memref<12x32xf32, #tpu.memory_space<vmem>>, vector<12x32xf32>
    %2 = arith.truncf %0 : vector<16x12xf32> to vector<16x12xbf16>
    %3 = arith.truncf %1 : vector<12x32xf32> to vector<12x32xbf16>
    %cst = arith.constant dense<0.000000e+00> : vector<16x32xf32>
    %4 = tpu.matmul %2, %3, %cst {dimension_numbers = #tpu.dot_dimension_numbers<[1], [0], [0], [1], [0, 0, 1, 1], [], []>} : vector<16x12xbf16>, vector<12x32xbf16>, vector<16x32xf32> -> vector<16x32xf32>
    %c0_3 = arith.constant 0 : index
    %c0_4 = arith.constant 0 : index
    %5 = vector.load %arg2[%c0_3, %c0_4] : memref<1x32xf32, #tpu.memory_space<vmem>>, vector<1x32xf32>
    %6 = vector.broadcast %5 : vector<1x32xf32> to vector<16x32xf32>
    %7 = arith.addf %4, %6 : vector<16x32xf32>
    %cst_5 = arith.constant 0.000000e+00 : f32
    %8 = vector.broadcast %cst_5 : f32 to vector<16x32xf32>
    %9 = arith.maximumf %7, %8 : vector<16x32xf32>
    %c0_6 = arith.constant 0 : index
    %c0_7 = arith.constant 0 : index
    %10 = vector.load %arg3[%c0_6, %c0_7] : memref<16x32xf32, #tpu.memory_space<vmem>>, vector<16x32xf32>
    tpu.vector_store %arg3[%c0_6, %c0_7], %9 {strides = array<i32>} : memref<16x32xf32, #tpu.memory_space<vmem>>, vector<16x32xf32>,
    return
  }
}

</mosaic_0001>

<llo_original>
// kernel: tpu_custom_call.1
$region0: #{tpu_custom_call.1}
  #allocation0 [shape = 'u32[]', space=smem, size = 0x4, offset = 0x4, fixed_abs, tag = 'smem constant byte address 0x4 - core index']
  #allocation1 [shape = 'u32[72,128]{1,0:T(1,128)}', space=vmem, size = 0x9000, scoped, tag = 'internal scratch']
  %s0 = inlined_call_operand.hbm [shape: f32[16,12], index: 0, kind: input, shape index: {}]
  %s1 = inlined_call_operand.hbm [shape: f32[12,32], index: 1, kind: input, shape index: {}]
  %s2 = inlined_call_operand.vmem [shape: f32[1,32], index: 2, kind: input, shape index: {}]
  %s3 = inlined_call_operand.hbm [shape: f32[16,32], index: 3, kind: output, shape index: {}]
  %s4 = sld [smem:[#allocation0]]
  $region30: #{tpu_custom_call.1} parent=0
    _
  %s6 = ssub.s32 1, %s4
  %s7 = scalar_select 0, %s6, %s4
  $region1: #{tpu_custom_call.1} parent=0
    #allocation2 [shape = 'u8[8192]{0}', space=vmem, size = 0x2000, scoped, tag = 'input window, operand 0, single buffered']
    #allocation3 [shape = 's32[1]{0}', space=sflag, size = 0x4, scoped, tag = 'scoped memory for tpu_custom_call.1']
    #allocation4 [shape = 's32[1]{0}', space=sflag, size = 0x4, scoped, tag = 'scoped memory for tpu_custom_call.1']
    #allocation5 [shape = 'u8[8192]{0}', space=vmem, size = 0x2000, scoped, tag = 'input window, operand 1, single buffered']
    #allocation6 [shape = 's32[1]{0}', space=sflag, size = 0x4, scoped, tag = 'scoped memory for tpu_custom_call.1']
    #allocation7 [shape = 'u8[8192]{0}', space=vmem, size = 0x2000, scoped, tag = 'output window, operand 0, single buffered']
    %8 = vsyncpa [#allocation3], 0
    %9 = vsyncpa [#allocation6], 0
    %10 = vsyncpa [#allocation4], 0
    // Predicated region
    $region2: #{tpu_custom_call.1} parent=1 // pred_check
      _
    $region3: #{tpu_custom_call.1} parent=1 // pred_check_branch
      %12 = sbr.rel (0) target = $region5
    $region4: #{tpu_custom_call.1} parent=1 // pred_region
      %14 = vsyncadd [#allocation3], 0
      %s15 = sshll.u32 %s0, 4
      %s16 = int_to_ptr.hbm [resolvable:$true] %s15
      %s17 = sshll.u32 [#allocation2], 4
      %s18 = int_to_ptr.vmem [resolvable:$true] %s17
      %23 = dma.hbm_to_vmem [thread:$0]  %s16, 256, %s18, [#allocation3], 128, 128, 8
    $region5: #{tpu_custom_call.1} parent=1 // pred_fallthru
      _
    // Predicated region
    $region6: #{tpu_custom_call.1} parent=1 // pred_check
      _
    $region7: #{tpu_custom_call.1} parent=1 // pred_check_branch
      %25 = sbr.rel (0) target = $region9
    $region8: #{tpu_custom_call.1} parent=1 // pred_region
      %27 = vsyncadd [#allocation6], 0
      %s28 = sshll.u32 %s1, 4
      %s29 = int_to_ptr.hbm [resolvable:$true] %s28
      %s30 = sshll.u32 [#allocation5], 4
      %s31 = int_to_ptr.vmem [resolvable:$true] %s30
      %36 = dma.hbm_to_vmem [thread:$0]  %s29, 256, %s31, [#allocation6], 128, 128, 8
    $region9: #{tpu_custom_call.1} parent=1 // pred_fallthru
      _
    // Predicated region
    $region10: #{tpu_custom_call.1} parent=1 // pred_check
      _
    $region11: #{tpu_custom_call.1} parent=1 // pred_check_branch
      %38 = sbr.rel (0) target = $region13
    $region12: #{tpu_custom_call.1} parent=1 // pred_region
      _
    $region13: #{tpu_custom_call.1} parent=1 // pred_fallthru
      _
    // Predicated region
    $region14: #{tpu_custom_call.1} parent=1 // pred_check
      _
    $region15: #{tpu_custom_call.1} parent=1 // pred_check_branch
      %40 = sbr.rel (0) target = $region17
    $region16: #{tpu_custom_call.1} parent=1 // pred_region
      %42 = dma.done [#allocation3], 256
    $region17: #{tpu_custom_call.1} parent=1 // pred_fallthru
      _
    // Predicated region
    $region18: #{tpu_custom_call.1} parent=1 // pred_check
      _
    $region19: #{tpu_custom_call.1} parent=1 // pred_check_branch
      %44 = sbr.rel (0) target = $region21
    $region20: #{tpu_custom_call.1} parent=1 // pred_region
      %46 = dma.done [#allocation6], 256
    $region21: #{tpu_custom_call.1} parent=1 // pred_fallthru
      _
    %v48 = vld [vmem:[#allocation2] sm:$0xff]
    %v49 = vld [vmem:[#allocation2 + $0x8] sm:$0xff]
    %v50 = vld [vmem:[#allocation5] sm:$0xff]
    %v51 = vld [vmem:[#allocation5 + $0x8] sm:$0xf]
    %v52 = vpack.c.bf16 %v49, %v48
    %v53 = vpack.c.bf16 %v51, %v50
    %v54 = vld [vmem:[%s2] sm:$0x1]
    %v56 = vperm.slane %v54, 0
    %vm58 = vcmask 97280
    %v60 = vsel %vm58, %v52, 0
    %vm62 = vcmask 1045504
    %v64 = vsel %vm62, %v53, 0
    %66 = vmatpush.bf16.msra.mxu0 0
    %67 = vmatpush.bf16.msra.mxu0 0
    %68 = vmatpush.bf16.msra.mxu0 0
    %69 = vmatpush.bf16.msra.mxu0 0
    %70 = vmatpush.bf16.msra.mxu0 0
    %71 = vmatpush.bf16.msra.mxu0 0
    %72 = vmatpush.bf16.msra.mxu0 0
    %73 = vmatpush.bf16.msra.mxu0 %v64
    %74 = vmatmul.bf16.gmra.mxu0 %v60
    %v75 = vpop.f32.mrf.mxu0
    %v76 = vadd.f32 %v56, %v75
    %v77 = vpop.f32.mrf.mxu0
    %v78 = vadd.f32 %v56, %v77
    %79 = vdwg.mxu0
    %v80 = vmax.f32 %v76, 0.0
    %v81 = vmax.f32 %v78, 0.0
    %vm82 = vcmask 261120
    %83 = vst.msk [vmem:[#allocation7] sm:$0xff] %vm82, %v80
    %84 = vst.msk [vmem:[#allocation7 + $0x8] sm:$0xff] %vm82, %v81
    // Predicated region
    $region22: #{tpu_custom_call.1} parent=1 // pred_check
      _
    $region23: #{tpu_custom_call.1} parent=1 // pred_check_branch
      %86 = sbr.rel (0) target = $region25
    $region24: #{tpu_custom_call.1} parent=1 // pred_region
      %88 = vsyncadd [#allocation4], 0
      %s89 = sshll.u32 [#allocation7], 4
      %s90 = int_to_ptr.vmem [resolvable:$true] %s89
      %s91 = sshll.u32 %s3, 4
      %s92 = int_to_ptr.hbm [resolvable:$true] %s91
      %97 = dma.vmem_to_hbm [thread:$0]  %s90, 256, %s92, [#allocation4], 128, 128, 8
    $region25: #{tpu_custom_call.1} parent=1 // pred_fallthru
      _
    // Predicated region
    $region26: #{tpu_custom_call.1} parent=1 // pred_check
      _
    $region27: #{tpu_custom_call.1} parent=1 // pred_check_branch
      %99 = sbr.rel (0) target = $region29
    $region28: #{tpu_custom_call.1} parent=1 // pred_region
      %101 = dma.done [#allocation4], 256
    $region29: #{tpu_custom_call.1} parent=1 // pred_fallthru
      _
    %102 = vsyncpa [#allocation3], 1
    %103 = vsyncpa [#allocation6], 1
    %104 = vsyncpa [#allocation4], 1

</llo_original>
